<compile_context>
chip_gen: v5e
topology: v5e:2x2
jax: 0.10.0
libtpu: 0.0.40
codegen_flags: <defaults>
</compile_context>

<pallas_src>
import functools

import jax
import jax.numpy as jnp
from jax import lax
from jax.experimental import pallas as pl
from jax.experimental.pallas import tpu as pltpu


def _round_up(x, m):
    return (x + m - 1) // m * m


def _round_down(x, m):
    return (x // m) * m


def _merge_entropy_kernel(x1_ref, x2_ref, e_ref,
                          w1a_ref, w1b_ref, w1c_ref, b1_ref,
                          w2_ref, b2_ref, o_ref):
    # fc1 as three accumulating MXU dots (f32 accumulation), no lane concat.
    h = jnp.dot(x1_ref[...], w1a_ref[...], preferred_element_type=jnp.float32)
    h = h + jnp.dot(x2_ref[...], w1b_ref[...], preferred_element_type=jnp.float32)
    h = h + jnp.dot(e_ref[...], w1c_ref[...], preferred_element_type=jnp.float32)
    # bias + ReLU on the VPU (f32).
    h = jnp.maximum(h + b1_ref[...], 0.0)
    # fc2: (1, hidden) contracted against h's hidden dim -> lane-dense (1, tb)
    # row.  MXU has huge slack here; avoids both the XLU cross-lane reduce and
    # the masked (tb, 1) column stores.
    y = lax.dot_general(w2_ref[...], h,
                        dimension_numbers=(((1,), (1,)), ((), ())),
                        preferred_element_type=jnp.float32)
    o_ref[...] = (y + b2_ref[0, 0]).astype(o_ref.dtype)


def merge_entropy_forward(x1, x2, entropy, w1, b1, w2, b2,
                          *, block_b=4096, compute_dtype=None):
    """x1, x2, entropy: [B, dim1]; w1: [3*dim1, 2*dim1] (pre-transposed, [in,out]);
       b1: [2*dim1]; w2: [2*dim1, 1]; b2: [1].  Returns [B, 1] float32."""
    B, dim1 = x1.shape
    hidden = 2 * dim1

    # Split W1 per input so the kernel never concatenates along lanes.
    w1a = w1[:dim1]
    w1b = w1[dim1:2 * dim1]
    w1c = w1[2 * dim1:]
    if compute_dtype is not None and compute_dtype != jnp.float32:
        # Cast only the (VMEM-resident) weights; never the activations here —
        # a standalone activation astype adds a full HBM read+write pass.
        w1a = w1a.astype(compute_dtype)
        w1b = w1b.astype(compute_dtype)
        w1c = w1c.astype(compute_dtype)
    b1_2d = b1.reshape(1, hidden).astype(jnp.float32)
    w2_row = w2.reshape(1, hidden).astype(jnp.float32)
    b2_2d = b2.reshape(1, 1).astype(jnp.float32)

    act_itemsize = jnp.dtype(x1.dtype).itemsize
    w_itemsize = jnp.dtype(w1a.dtype).itemsize
    # bf16 activations pack two rows per sublane -> 16-row alignment; f32 -> 8.
    row_align = 16 if act_itemsize == 2 else 8

    # Batch tile:
    #   * at most block_b,
    #   * >= 2 grid steps when possible (v7x: 2 TensorCores share the grid),
    #   * sized so double-buffered activation blocks + resident weights + the
    #     f32 h intermediate fit a conservative cross-generation VMEM budget.
    vmem_budget = 24 * 1024 * 1024
    weight_bytes = 3 * dim1 * hidden * w_itemsize + 2 * hidden * 4 + 128
    per_row_bytes = 3 * 2 * dim1 * act_itemsize + hidden * 4 + 2 * 4
    tb_budget = max(row_align,
                    _round_down(max(vmem_budget - weight_bytes, 0)
                                // max(per_row_bytes, 1), row_align))
    tb_two_steps = _round_up(pl.cdiv(B, 2), row_align)
    tb = max(row_align, min(block_b, tb_two_steps, tb_budget))

    nb = pl.cdiv(B, tb)   # ragged last block handled by Pallas masking
    Bp = nb * tb

    act_spec = pl.BlockSpec((tb, dim1), lambda i: (i, 0))
    wchunk_spec = pl.BlockSpec((dim1, hidden), lambda i: (0, 0))   # VMEM-resident
    row_spec = pl.BlockSpec((1, hidden), lambda i: (0, 0))
    b2_spec = pl.BlockSpec(memory_space=pltpu.MemorySpace.SMEM)    # scalar bias
    out_spec = pl.BlockSpec((1, tb), lambda i: (i, 0))             # lane-dense

    # VMEM limit: enough for this tiling (with headroom), capped below the
    # physical capacity of the chip we are on (64 MiB on v7x, 128 MiB v5e/v6e).
    vmem_need = (2 * 3 * tb * dim1 * act_itemsize + weight_bytes
                 + tb * hidden * 4 + 2 * tb * 4)
    try:
        phys_vmem = pltpu.get_tpu_info().vmem_capacity_bytes
    except Exception:
        phys_vmem = 64 * 1024 * 1024   # conservative fallback
    vmem_limit = int(min(max(32 * 1024 * 1024, 2 * vmem_need),
                         (3 * phys_vmem) // 4))

    flops = 2 * Bp * (3 * dim1) * hidden + 2 * Bp * hidden
    bytes_accessed = (3 * B * dim1 * act_itemsize          # activations in
                      + 3 * dim1 * hidden * w_itemsize     # W1 chunks
                      + (2 * hidden + 1) * 4               # b1, w2 row, b2
                      + Bp * 4)                            # output

    out = pl.pallas_call(
        _merge_entropy_kernel,
        out_shape=jax.ShapeDtypeStruct((nb, tb), jnp.float32),
        grid=(nb,),
        in_specs=[act_spec, act_spec, act_spec,
                  wchunk_spec, wchunk_spec, wchunk_spec, row_spec,
                  row_spec, b2_spec],
        out_specs=out_spec,
        compiler_params=pltpu.CompilerParams(
            dimension_semantics=("parallel",),
            vmem_limit_bytes=vmem_limit),
        cost_estimate=pl.CostEstimate(flops=flops, transcendentals=0,
                                      bytes_accessed=bytes_accessed),
    )(x1, x2, entropy, w1a, w1b, w1c, b1_2d, w2_row, b2_2d)

    # (nb, tb) -> (B, 1): contiguous reshape + slice, no data relayout.
    return out.reshape(-1)[:B].reshape(B, 1)


def init_params(key, dim1):
    """Deterministic init matching the PyTorch module's shapes.
       fc1.weight: [2*dim1, 3*dim1] xavier_normal; fc2.weight: [1, 2*dim1] xavier_normal;
       biases: PyTorch default uniform(-1/sqrt(fan_in), 1/sqrt(fan_in))."""
    k1, k2, k3, k4 = jax.random.split(key, 4)
    fan_in1, fan_out1 = 3 * dim1, 2 * dim1
    std1 = (2.0 / (fan_in1 + fan_out1)) ** 0.5
    w1_t = jax.random.normal(k1, (fan_out1, fan_in1), jnp.float32) * std1  # torch layout [out, in]
    b1 = jax.random.uniform(k2, (fan_out1,), jnp.float32,
                            -1.0 / fan_in1 ** 0.5, 1.0 / fan_in1 ** 0.5)
    fan_in2, fan_out2 = 2 * dim1, 1
    std2 = (2.0 / (fan_in2 + fan_out2)) ** 0.5
    w2_t = jax.random.normal(k3, (fan_out2, fan_in2), jnp.float32) * std2
    b2 = jax.random.uniform(k4, (fan_out2,), jnp.float32,
                            -1.0 / fan_in2 ** 0.5, 1.0 / fan_in2 ** 0.5)
    # Pre-transpose to [in, out] for the kernel.
    return w1_t.T, b1, w2_t.T, b2


def reference_forward(x1, x2, entropy, w1, b1, w2, b2):
    x = jnp.concatenate([x1, x2, entropy], axis=1)
    h = jnp.maximum(x @ w1 + b1, 0.0)
    return h @ w2 + b2


if __name__ == "__main__":
    B, dim1 = 8, 32
    key = jax.random.PRNGKey(0)
    kx1, kx2, ke, kp = jax.random.split(key, 4)
    x1 = jax.random.normal(kx1, (B, dim1), jnp.float32)
    x2 = jax.random.normal(kx2, (B, dim1), jnp.float32)
    entropy = jax.random.normal(ke, (B, dim1), jnp.float32)
    w1, b1, w2, b2 = init_params(kp, dim1)

    fwd = jax.jit(functools.partial(merge_entropy_forward, block_b=4096))
    out = fwd(x1, x2, entropy, w1, b1, w2, b2)
    out = jax.block_until_ready(out)

    ref = reference_forward(x1, x2, entropy, w1, b1, w2, b2)
    assert out.shape == (B, 1)
    assert jnp.allclose(out, ref, atol=1e-5, rtol=1e-5)
    print("KERNEL_OK")
</pallas_src>

<mosaic_0001>
module attributes {stable_mosaic.version = 11 : i64} {
  func.func @_merge_entropy_kernel(%arg0: i32, %arg1: memref<8x32xf32, #tpu.memory_space<vmem>>, %arg2: memref<8x32xf32, #tpu.memory_space<vmem>>, %arg3: memref<8x32xf32, #tpu.memory_space<vmem>>, %arg4: memref<32x64xf32, #tpu.memory_space<vmem>>, %arg5: memref<32x64xf32, #tpu.memory_space<vmem>>, %arg6: memref<32x64xf32, #tpu.memory_space<vmem>>, %arg7: memref<1x64xf32, #tpu.memory_space<vmem>>, %arg8: memref<1x64xf32, #tpu.memory_space<vmem>>, %arg9: memref<1x1xf32, #tpu.memory_space<smem>>, %arg10: memref<1x8xf32, #tpu.memory_space<vmem>>) attributes {dimension_semantics = [#tpu.dimension_semantics<parallel>], iteration_bounds = array<i64: 1>, scalar_prefetch = 0 : i64, scratch_operands = 0 : i64, tpu.core_type = #tpu.core_type<tc>, window_params = [{transform_indices = @transform_0, window_bounds = array<i64: 8, 32>}, {transform_indices = @transform_1, window_bounds = array<i64: 8, 32>}, {transform_indices = @transform_2, window_bounds = array<i64: 8, 32>}, {pipeline_mode = #tpu.pipeline_mode<synchronous>, transform_indices = @transform_3, window_bounds = array<i64: 32, 64>}, {pipeline_mode = #tpu.pipeline_mode<synchronous>, transform_indices = @transform_4, window_bounds = array<i64: 32, 64>}, {pipeline_mode = #tpu.pipeline_mode<synchronous>, transform_indices = @transform_5, window_bounds = array<i64: 32, 64>}, {pipeline_mode = #tpu.pipeline_mode<synchronous>, transform_indices = @transform_6, window_bounds = array<i64: 1, 64>}, {pipeline_mode = #tpu.pipeline_mode<synchronous>, transform_indices = @transform_7, window_bounds = array<i64: 1, 64>}, {transform_indices = @transform_8, window_bounds = array<i64: 1, 1>}, {transform_indices = @transform_9, window_bounds = array<i64: 1, 8>}]} {
    %c0 = arith.constant 0 : index
    %c0_0 = arith.constant 0 : index
    %0 = vector.load %arg1[%c0, %c0_0] : memref<8x32xf32, #tpu.memory_space<vmem>>, vector<8x32xf32>
    %c0_1 = arith.constant 0 : index
    %c0_2 = arith.constant 0 : index
    %1 = vector.load %arg4[%c0_1, %c0_2] : memref<32x64xf32, #tpu.memory_space<vmem>>, vector<32x64xf32>
    %cst = arith.constant dense<0.000000e+00> : vector<8x64xf32>
    %2 = tpu.matmul %0, %1, %cst {dimension_numbers = #tpu.dot_dimension_numbers<[1], [0], [0], [1], [0, 0, 1, 1], [], []>} : vector<8x32xf32>, vector<32x64xf32>, vector<8x64xf32> -> vector<8x64xf32>
    %c0_3 = arith.constant 0 : index
    %c0_4 = arith.constant 0 : index
    %3 = vector.load %arg2[%c0_3, %c0_4] : memref<8x32xf32, #tpu.memory_space<vmem>>, vector<8x32xf32>
    %c0_5 = arith.constant 0 : index
    %c0_6 = arith.constant 0 : index
    %4 = vector.load %arg5[%c0_5, %c0_6] : memref<32x64xf32, #tpu.memory_space<vmem>>, vector<32x64xf32>
    %cst_7 = arith.constant dense<0.000000e+00> : vector<8x64xf32>
    %5 = tpu.matmul %3, %4, %cst_7 {dimension_numbers = #tpu.dot_dimension_numbers<[1], [0], [0], [1], [0, 0, 1, 1], [], []>} : vector<8x32xf32>, vector<32x64xf32>, vector<8x64xf32> -> vector<8x64xf32>
    %6 = arith.addf %2, %5 : vector<8x64xf32>
    %c0_8 = arith.constant 0 : index
    %c0_9 = arith.constant 0 : index
    %7 = vector.load %arg3[%c0_8, %c0_9] : memref<8x32xf32, #tpu.memory_space<vmem>>, vector<8x32xf32>
    %c0_10 = arith.constant 0 : index
    %c0_11 = arith.constant 0 : index
    %8 = vector.load %arg6[%c0_10, %c0_11] : memref<32x64xf32, #tpu.memory_space<vmem>>, vector<32x64xf32>
    %cst_12 = arith.constant dense<0.000000e+00> : vector<8x64xf32>
    %9 = tpu.matmul %7, %8, %cst_12 {dimension_numbers = #tpu.dot_dimension_numbers<[1], [0], [0], [1], [0, 0, 1, 1], [], []>} : vector<8x32xf32>, vector<32x64xf32>, vector<8x64xf32> -> vector<8x64xf32>
    %10 = arith.addf %6, %9 : vector<8x64xf32>
    %c0_13 = arith.constant 0 : index
    %c0_14 = arith.constant 0 : index
    %11 = vector.load %arg7[%c0_13, %c0_14] : memref<1x64xf32, #tpu.memory_space<vmem>>, vector<1x64xf32>
    %12 = vector.broadcast %11 : vector<1x64xf32> to vector<8x64xf32>
    %13 = arith.addf %10, %12 : vector<8x64xf32>
    %cst_15 = arith.constant 0.000000e+00 : f32
    %14 = vector.broadcast %cst_15 : f32 to vector<8x64xf32>
    %15 = arith.maximumf %13, %14 : vector<8x64xf32>
    %c0_16 = arith.constant 0 : index
    %c0_17 = arith.constant 0 : index
    %16 = vector.load %arg8[%c0_16, %c0_17] : memref<1x64xf32, #tpu.memory_space<vmem>>, vector<1x64xf32>
    %cst_18 = arith.constant dense<0.000000e+00> : vector<1x8xf32>
    %17 = tpu.matmul %16, %15, %cst_18 {dimension_numbers = #tpu.dot_dimension_numbers<[1], [1], [0], [0], [0, 0, 1, 0], [], []>} : vector<1x64xf32>, vector<8x64xf32>, vector<1x8xf32> -> vector<1x8xf32>
    %c0_19 = arith.constant 0 : index
    %c0_20 = arith.constant 0 : index
    %18 = memref.load %arg9[%c0_19, %c0_20] : memref<1x1xf32, #tpu.memory_space<smem>>
    %19 = vector.broadcast %18 : f32 to vector<1x8xf32>
    %20 = arith.addf %17, %19 : vector<1x8xf32>
    %c0_21 = arith.constant 0 : index
    %c0_22 = arith.constant 0 : index
    %21 = vector.load %arg10[%c0_21, %c0_22] : memref<1x8xf32, #tpu.memory_space<vmem>>, vector<1x8xf32>
    tpu.vector_store %arg10[%c0_21, %c0_22], %20 {strides = array<i32>} : memref<1x8xf32, #tpu.memory_space<vmem>>, vector<1x8xf32>,
    return
  }
  func.func @transform_0(%arg0: i32) -> (i32, i32) {
    %c0_i32 = arith.constant 0 : i32
    %c0_i32_0 = arith.constant 0 : i32
    return %arg0, %c0_i32 : i32, i32
  }
  func.func @transform_1(%arg0: i32) -> (i32, i32) {
    %c0_i32 = arith.constant 0 : i32
    %c0_i32_0 = arith.constant 0 : i32
    return %arg0, %c0_i32 : i32, i32
  }
  func.func @transform_2(%arg0: i32) -> (i32, i32) {
    %c0_i32 = arith.constant 0 : i32
    %c0_i32_0 = arith.constant 0 : i32
    return %arg0, %c0_i32 : i32, i32
  }
  func.func @transform_3(%arg0: i32) -> (i32, i32) {
    %c0_i32 = arith.constant 0 : i32
    %c0_i32_0 = arith.constant 0 : i32
    %c0_i32_1 = arith.constant 0 : i32
    return %c0_i32, %c0_i32_0 : i32, i32
  }
  func.func @transform_4(%arg0: i32) -> (i32, i32) {
    %c0_i32 = arith.constant 0 : i32
    %c0_i32_0 = arith.constant 0 : i32
    %c0_i32_1 = arith.constant 0 : i32
    return %c0_i32, %c0_i32_0 : i32, i32
  }
  func.func @transform_5(%arg0: i32) -> (i32, i32) {
    %c0_i32 = arith.constant 0 : i32
    %c0_i32_0 = arith.constant 0 : i32
    %c0_i32_1 = arith.constant 0 : i32
    return %c0_i32, %c0_i32_0 : i32, i32
  }
  func.func @transform_6(%arg0: i32) -> (i32, i32) {
    %c0_i32 = arith.constant 0 : i32
    %c0_i32_0 = arith.constant 0 : i32
    %c0_i32_1 = arith.constant 0 : i32
    return %c0_i32, %c0_i32_0 : i32, i32
  }
  func.func @transform_7(%arg0: i32) -> (i32, i32) {
    %c0_i32 = arith.constant 0 : i32
    %c0_i32_0 = arith.constant 0 : i32
    %c0_i32_1 = arith.constant 0 : i32
    return %c0_i32, %c0_i32_0 : i32, i32
  }
  func.func @transform_8(%arg0: i32) -> (i32, i32) {
    %c0_i32 = arith.constant 0 : i32
    %c0_i32_0 = arith.constant 0 : i32
    %c0_i32_1 = arith.constant 0 : i32
    return %c0_i32, %c0_i32_0 : i32, i32
  }
  func.func @transform_9(%arg0: i32) -> (i32, i32) {
    %c0_i32 = arith.constant 0 : i32
    %c0_i32_0 = arith.constant 0 : i32
    return %arg0, %c0_i32 : i32, i32
  }
}

</mosaic_0001>

<llo_original>
// kernel: merge_entropy_forward.1
$region0: #{merge_entropy_forward.1}
  #allocation0 [shape = 'u32[]', space=smem, size = 0x4, offset = 0x4, fixed_abs, tag = 'smem constant byte address 0x4 - core index']
  #allocation1 [shape = 'u32[72,128]{1,0:T(1,128)}', space=vmem, size = 0x9000, scoped, tag = 'internal scratch']
  #allocation2 [shape = 'f32[1,1]{1,0:T(1,128)S(6)}', space=smem, size = 0x200, scoped, tag = 'scoped memory for merge_entropy_forward.1']
  %s0 = inlined_call_operand.vmem [shape: f32[8,32], index: 0, kind: input, shape index: {}]
  %s1 = inlined_call_operand.vmem [shape: f32[8,32], index: 1, kind: input, shape index: {}]
  %s2 = inlined_call_operand.vmem [shape: f32[8,32], index: 2, kind: input, shape index: {}]
  %s3 = inlined_call_operand.vmem [shape: f32[32,64], index: 3, kind: input, shape index: {}]
  %s4 = inlined_call_operand.vmem [shape: f32[32,64], index: 4, kind: input, shape index: {}]
  %s5 = inlined_call_operand.vmem [shape: f32[32,64], index: 5, kind: input, shape index: {}]
  %s6 = inlined_call_operand.vmem [shape: f32[1,64], index: 6, kind: input, shape index: {}]
  %s7 = inlined_call_operand.vmem [shape: f32[1,64], index: 7, kind: input, shape index: {}]
  %s8 = inlined_call_operand.<no memory space> [shape: f32[1,1], index: 8, kind: input, shape index: {}]
  %s9 = inlined_call_operand.hbm [shape: f32[1,8], index: 9, kind: output, shape index: {}]
  %s10 = sld [smem:[#allocation0]]
  $region46: #{merge_entropy_forward.1} parent=0
    _
  %s12 = ssub.s32 1, %s10
  %s13 = scalar_select 0, %s12, %s10
  %14 = sst [smem:[#allocation2]] %s8
  $region1: #{merge_entropy_forward.1} parent=0
    #allocation3 [shape = 'u8[512]{0}', space=vmem, size = 0x400, scoped, tag = 'output window, operand 0, single buffered']
    #allocation4 [shape = 's32[1]{0}', space=sflag, size = 0x4, scoped, tag = 'scoped memory for merge_entropy_forward.1']
    %15 = vsyncpa [#allocation4], 0
    // Predicated region
    $region2: #{merge_entropy_forward.1} parent=1 // pred_check
      _
    $region3: #{merge_entropy_forward.1} parent=1 // pred_check_branch
      %17 = sbr.rel (0) target = $region5
    $region4: #{merge_entropy_forward.1} parent=1 // pred_region
      _
    $region5: #{merge_entropy_forward.1} parent=1 // pred_fallthru
      _
    // Predicated region
    $region6: #{merge_entropy_forward.1} parent=1 // pred_check
      _
    $region7: #{merge_entropy_forward.1} parent=1 // pred_check_branch
      %19 = sbr.rel (0) target = $region9
    $region8: #{merge_entropy_forward.1} parent=1 // pred_region
      _
    $region9: #{merge_entropy_forward.1} parent=1 // pred_fallthru
      _
    // Predicated region
    $region10: #{merge_entropy_forward.1} parent=1 // pred_check
      _
    $region11: #{merge_entropy_forward.1} parent=1 // pred_check_branch
      %21 = sbr.rel (0) target = $region13
    $region12: #{merge_entropy_forward.1} parent=1 // pred_region
      _
    $region13: #{merge_entropy_forward.1} parent=1 // pred_fallthru
      _
    // Predicated region
    $region14: #{merge_entropy_forward.1} parent=1 // pred_check
      _
    $region15: #{merge_entropy_forward.1} parent=1 // pred_check_branch
      %23 = sbr.rel (0) target = $region17
    $region16: #{merge_entropy_forward.1} parent=1 // pred_region
      _
    $region17: #{merge_entropy_forward.1} parent=1 // pred_fallthru
      _
    // Predicated region
    $region18: #{merge_entropy_forward.1} parent=1 // pred_check
      _
    $region19: #{merge_entropy_forward.1} parent=1 // pred_check_branch
      %25 = sbr.rel (0) target = $region21
    $region20: #{merge_entropy_forward.1} parent=1 // pred_region
      _
    $region21: #{merge_entropy_forward.1} parent=1 // pred_fallthru
      _
    // Predicated region
    $region22: #{merge_entropy_forward.1} parent=1 // pred_check
      _
    $region23: #{merge_entropy_forward.1} parent=1 // pred_check_branch
      %27 = sbr.rel (0) target = $region25
    $region24: #{merge_entropy_forward.1} parent=1 // pred_region
      _
    $region25: #{merge_entropy_forward.1} parent=1 // pred_fallthru
      _
    // Predicated region
    $region26: #{merge_entropy_forward.1} parent=1 // pred_check
      _
    $region27: #{merge_entropy_forward.1} parent=1 // pred_check_branch
      %29 = sbr.rel (0) target = $region29
    $region28: #{merge_entropy_forward.1} parent=1 // pred_region
      _
    $region29: #{merge_entropy_forward.1} parent=1 // pred_fallthru
      _
    // Predicated region
    $region30: #{merge_entropy_forward.1} parent=1 // pred_check
      _
    $region31: #{merge_entropy_forward.1} parent=1 // pred_check_branch
      %31 = sbr.rel (0) target = $region33
    $region32: #{merge_entropy_forward.1} parent=1 // pred_region
      _
    $region33: #{merge_entropy_forward.1} parent=1 // pred_fallthru
      _
    // Predicated region
    $region34: #{merge_entropy_forward.1} parent=1 // pred_check
      _
    $region35: #{merge_entropy_forward.1} parent=1 // pred_check_branch
      %33 = sbr.rel (0) target = $region37
    $region36: #{merge_entropy_forward.1} parent=1 // pred_region
      _
    $region37: #{merge_entropy_forward.1} parent=1 // pred_fallthru
      _
    %v34 = vld [vmem:[%s0] sm:$0xff]
    %v35 = vld [vmem:[%s3] sm:$0xff]
    %v36 = vld [vmem:[%s3 + $0x8] sm:$0xff]
    %v37 = vld [vmem:[%s3 + $0x10] sm:$0xff]
    %v38 = vld [vmem:[%s3 + $0x18] sm:$0xff]
    %v39 = vld [vmem:[%s1] sm:$0xff]
    %v40 = vld [vmem:[%s4] sm:$0xff]
    %v41 = vld [vmem:[%s4 + $0x8] sm:$0xff]
    %v42 = vld [vmem:[%s4 + $0x10] sm:$0xff]
    %v43 = vld [vmem:[%s4 + $0x18] sm:$0xff]
    %vm44 = vcmask 261120
    %v46 = vsel %vm44, %v39, 0
    %48 = vmatpush.msra.mxu0 0.0
    %49 = vmatpush.msra.mxu0 0.0
    %50 = vmatpush.msra.mxu0 0.0
    %51 = vmatpush.msra.mxu0 0.0
    %52 = vmatpush.msra.mxu0 0.0
    %53 = vmatpush.msra.mxu0 0.0
    %54 = vmatpush.msra.mxu0 0.0
    %55 = vmatpush.msra.mxu0 0.0
    %56 = vmatpush.msra.mxu0 0.0
    %57 = vmatpush.msra.mxu0 0.0
    %58 = vmatpush.msra.mxu0 0.0
    %59 = vmatpush.msra.mxu0 0.0
    %60 = vmatpush.msra.mxu0 %v43
    %61 = vmatpush.msra.mxu0 %v42
    %62 = vmatpush.msra.mxu0 %v41
    %63 = vmatpush.msra.mxu0 %v40
    %64 = vmatmul.f32.gmra.mxu0 %v46
    %v65 = vpop.f32.mrf.mxu0
    %v66 = vadd.f32 0.0, %v65
    %67 = vdwg.mxu0
    %v69 = vsel %vm44, %v34, 0
    %71 = vmatpush.msra.mxu0 0.0
    %72 = vmatpush.msra.mxu0 0.0
    %73 = vmatpush.msra.mxu0 0.0
    %74 = vmatpush.msra.mxu0 0.0
    %75 = vmatpush.msra.mxu0 0.0
    %76 = vmatpush.msra.mxu0 0.0
    %77 = vmatpush.msra.mxu0 0.0
    %78 = vmatpush.msra.mxu0 0.0
    %79 = vmatpush.msra.mxu0 0.0
    %80 = vmatpush.msra.mxu0 0.0
    %81 = vmatpush.msra.mxu0 0.0
    %82 = vmatpush.msra.mxu0 0.0
    %83 = vmatpush.msra.mxu0 %v38
    %84 = vmatpush.msra.mxu0 %v37
    %85 = vmatpush.msra.mxu0 %v36
    %86 = vmatpush.msra.mxu0 %v35
    %87 = vmatmul.f32.gmra.mxu0 %v69
    %v88 = vpop.f32.mrf.mxu0
    %v89 = vadd.f32 %v66, %v88
    %90 = vdwg.mxu0
    %v91 = vld [vmem:[%s2] sm:$0xff]
    %v92 = vld [vmem:[%s5] sm:$0xff]
    %v93 = vld [vmem:[%s5 + $0x8] sm:$0xff]
    %v94 = vld [vmem:[%s5 + $0x10] sm:$0xff]
    %v95 = vld [vmem:[%s5 + $0x18] sm:$0xff]
    %v97 = vsel %vm44, %v91, 0
    %99 = vmatpush.msra.mxu0 0.0
    %100 = vmatpush.msra.mxu0 0.0
    %101 = vmatpush.msra.mxu0 0.0
    %102 = vmatpush.msra.mxu0 0.0
    %103 = vmatpush.msra.mxu0 0.0
    %104 = vmatpush.msra.mxu0 0.0
    %105 = vmatpush.msra.mxu0 0.0
    %106 = vmatpush.msra.mxu0 0.0
    %107 = vmatpush.msra.mxu0 0.0
    %108 = vmatpush.msra.mxu0 0.0
    %109 = vmatpush.msra.mxu0 0.0
    %110 = vmatpush.msra.mxu0 0.0
    %111 = vmatpush.msra.mxu0 %v95
    %112 = vmatpush.msra.mxu0 %v94
    %113 = vmatpush.msra.mxu0 %v93
    %114 = vmatpush.msra.mxu0 %v92
    %115 = vmatmul.f32.gmra.mxu0 %v97
    %v116 = vpop.f32.mrf.mxu0
    %v117 = vadd.f32 0.0, %v116
    %118 = vdwg.mxu0
    %v119 = vadd.f32 %v89, %v117
    %v120 = vld [vmem:[%s6] sm:$0x1]
    %v122 = vperm.slane %v120, 0
    %v124 = vadd.f32 %v119, %v122
    %v125 = vmax.f32 %v124, 0.0
    %v126 = vld [vmem:[%s7] sm:$0x1]
    %s127 = sld [smem:[#allocation2]]
    %v128 = vstv %s127
    %vm129 = vcmask 523264
    %v131 = vsel %vm129, %v126, 0
    %v134 = vsel %vm129, %v125, 0
    %136 = vmatpush.xpose.msra.mxu0 0.0
    %137 = vmatpush.xpose.msra.mxu0 0.0
    %138 = vmatpush.xpose.msra.mxu0 0.0
    %139 = vmatpush.xpose.msra.mxu0 0.0
    %140 = vmatpush.xpose.msra.mxu0 0.0
    %141 = vmatpush.xpose.msra.mxu0 0.0
    %142 = vmatpush.xpose.msra.mxu0 0.0
    %143 = vmatpush.xpose.msra.mxu0 0.0
    %144 = vmatpush.xpose.msra.mxu0 0.0
    %145 = vmatpush.xpose.msra.mxu0 0.0
    %146 = vmatpush.xpose.msra.mxu0 0.0
    %147 = vmatpush.xpose.msra.mxu0 0.0
    %148 = vmatpush.xpose.msra.mxu0 0.0
    %149 = vmatpush.xpose.msra.mxu0 0.0
    %150 = vmatpush.xpose.msra.mxu0 0.0
    %151 = vmatpush.xpose.msra.mxu0 %v134
    %152 = vmatmul.f32.gmra.mxu0 %v131
    %v153 = vpop.f32.mrf.mxu0
    %v154 = vadd.f32 %v128, %v153
    %155 = vdwg.mxu0
    %vm156 = vcmask 57344
    %157 = vst.msk [vmem:[#allocation3] sm:$0x1] %vm156, %v154
    // Predicated region
    $region38: #{merge_entropy_forward.1} parent=1 // pred_check
      _
    $region39: #{merge_entropy_forward.1} parent=1 // pred_check_branch
      %159 = sbr.rel (0) target = $region41
    $region40: #{merge_entropy_forward.1} parent=1 // pred_region
      %161 = vsyncadd [#allocation4], 0
      %s163 = sshll.u32 [#allocation3], 4
      %s164 = int_to_ptr.vmem [resolvable:$true] %s163
      %s165 = sshll.u32 %s9, 4
      %s166 = int_to_ptr.hbm [resolvable:$true] %s165
      %168 = dma.vmem_to_hbm [thread:$0]  %s164, 16, %s166, [#allocation4]
    $region41: #{merge_entropy_forward.1} parent=1 // pred_fallthru
      _
    // Predicated region
    $region42: #{merge_entropy_forward.1} parent=1 // pred_check
      _
    $region43: #{merge_entropy_forward.1} parent=1 // pred_check_branch
      %170 = sbr.rel (0) target = $region45
    $region44: #{merge_entropy_forward.1} parent=1 // pred_region
      %172 = dma.done [#allocation4], 16
    $region45: #{merge_entropy_forward.1} parent=1 // pred_fallthru
      _
    %173 = vsyncpa [#allocation4], 1

</llo_original>
